<compile_context>
chip_gen: v6e
topology: v6e:2x2x1
jax: 0.10.0
libtpu: 0.0.40
codegen_flags: <defaults>
</compile_context>

<pallas_src>
import jax
import jax.numpy as jnp
from jax.experimental import pallas as pl
from jax.experimental.pallas import tpu as pltpu

LANES = 128


def _h_sigmoid_kernel(x_ref, o_ref):
    x = x_ref[...]
    # relu6(x + 3) / 6  ==  clamp(x + 3, 0, 6) * (1/6)
    o_ref[...] = (jnp.clip(x + 3.0, 0.0, 6.0) * (1.0 / 6.0)).astype(o_ref.dtype)


def _round_up(v: int, m: int) -> int:
    return ((v + m - 1) // m) * m


def _target_block_bytes() -> int:
    """Per-buffer block size, generation aware (conservative on unknown)."""
    try:
        kind = jax.devices()[0].device_kind.lower()
    except Exception:
        kind = ""
    if ("v6" in kind) or ("v7" in kind):
        # 32 MiB scoped-VMEM default: 2 in + 2 out buffers @ 4 MiB = 16 MiB.
        return 4 * 1024 * 1024
    # v5e / older (16 MiB scoped default) or unknown: stay at ~2 MiB.
    return 2 * 1024 * 1024


def h_sigmoid(x: jax.Array, block_bytes: int | None = None,
              inplace: bool = False) -> jax.Array:
    """Elementwise hard-sigmoid. Accepts any shape (NCHW expected)."""
    orig_shape = x.shape
    dtype = x.dtype
    n = x.size
    if n == 0:
        return x
    if not jnp.issubdtype(dtype, jnp.floating):
        raise TypeError(f"h_sigmoid expects a floating dtype, got {dtype}")

    itemsize = jnp.dtype(dtype).itemsize
    # Native packed sublane tile: 8 rows for 4-byte, 16 for 2-byte dtypes.
    sublane = max(8, 32 // itemsize)
    if block_bytes is None:
        block_bytes = _target_block_bytes()

    x_flat = x.reshape(-1)  # contiguous reshape: free, no HBM pass

    # --- choose a lane-dense 2-D view without any padding copy ---
    lane_w = next((w for w in (1024, 512, 256, 128) if n % w == 0), None)

    if lane_w is not None:
        # Aligned path (the common NN case): (rows, lane_w) slab, tile rows.
        rows = n // lane_w
        x2d = x_flat.reshape(rows, lane_w)
        block_rows = max(sublane, block_bytes // (lane_w * itemsize))
        block_rows = _round_up(block_rows, sublane)

        if rows <= sublane:
            tile_rows = rows  # single block equal to full array dims (legal)
        else:
            # >= 4 grid steps when possible: >= 2 pipelined iterations per
            # v7x TensorCore so input DMA / output writeback overlap compute.
            quarter = _round_up(pl.cdiv(rows, 4), sublane)
            tile_rows = max(sublane, min(block_rows, quarter))
            g = pl.cdiv(rows, tile_rows)
            if g > 1 and g % 2 == 1:
                # Nudge to an even step count so both cores get equal work.
                alt = _round_up(pl.cdiv(rows, g + 1), sublane)
                if alt >= sublane and pl.cdiv(rows, alt) % 2 == 0:
                    tile_rows = alt

        grid = (pl.cdiv(rows, tile_rows),)
        in_spec = pl.BlockSpec((tile_rows, lane_w), lambda i: (i, 0))
        out_spec = pl.BlockSpec((tile_rows, lane_w), lambda i: (i, 0))
        out_shape2d = (rows, lane_w)
    else:
        # Ragged path (n % 128 != 0, rare): no pad / no slice.  Slab (R, C)
        # with R | n, tile along the lane axis; Pallas masks the partial
        # final block.  Costs some sublane/lane density, never extra HBM.
        R = next((r for r in (256, 128, 64, 32, 16, 8, 4, 2) if n % r == 0), 1)
        C = n // R
        x2d = x_flat.reshape(R, C)
        r_pad = _round_up(R, 8)  # VMEM sublane padding per block
        lane_block = max(LANES,
                         (block_bytes // (r_pad * itemsize)) // LANES * LANES)
        if C <= lane_block:
            lane_block = C  # single full-dim block (always legal)
        grid = (pl.cdiv(C, lane_block),)
        in_spec = pl.BlockSpec((R, lane_block), lambda i: (0, i))
        out_spec = pl.BlockSpec((R, lane_block), lambda i: (0, i))
        out_shape2d = (R, C)

    out2d = pl.pallas_call(
        _h_sigmoid_kernel,
        out_shape=jax.ShapeDtypeStruct(out_shape2d, dtype),
        grid_spec=pltpu.PrefetchScalarGridSpec(
            num_scalar_prefetch=0,
            grid=grid,
            in_specs=[in_spec],
            out_specs=out_spec,
        ),
        compiler_params=pltpu.CompilerParams(
            dimension_semantics=("parallel",),
        ),
        cost_estimate=pl.CostEstimate(
            flops=4 * n,
            transcendentals=0,
            bytes_accessed=2 * n * itemsize,
        ),
        input_output_aliases=({0: 0} if inplace else {}),
    )(x2d)

    return out2d.reshape(orig_shape)


if __name__ == "__main__":
    key = jax.random.PRNGKey(0)
    # NCHW input, small shapes
    x = jax.random.normal(key, (2, 4, 16, 16), dtype=jnp.float32) * 4.0

    y = h_sigmoid(x)
    y = jax.block_until_ready(y)

    # Reference check in plain JAX
    ref = jnp.clip(x + 3.0, 0.0, 6.0) / 6.0
    assert y.shape == x.shape and y.dtype == x.dtype
    assert jnp.max(jnp.abs(y - ref)) < 1e-6

    print("KERNEL_OK")
</pallas_src>

<mosaic_0001>
module attributes {stable_mosaic.version = 11 : i64} {
  func.func @_h_sigmoid_kernel(%arg0: i32, %arg1: memref<2x1024xf32, #tpu.memory_space<vmem>>, %arg2: memref<2x1024xf32, #tpu.memory_space<vmem>>) attributes {dimension_semantics = [#tpu.dimension_semantics<parallel>], iteration_bounds = array<i64: 1>, scalar_prefetch = 0 : i64, scratch_operands = 0 : i64, tpu.core_type = #tpu.core_type<tc>, window_params = [{transform_indices = @transform_0, window_bounds = array<i64: 2, 1024>}, {transform_indices = @transform_1, window_bounds = array<i64: 2, 1024>}]} {
    %c0 = arith.constant 0 : index
    %c0_0 = arith.constant 0 : index
    %0 = vector.load %arg1[%c0, %c0_0] : memref<2x1024xf32, #tpu.memory_space<vmem>>, vector<2x1024xf32>
    %cst = arith.constant 3.000000e+00 : f32
    %1 = vector.broadcast %cst : f32 to vector<2x1024xf32>
    %2 = arith.addf %0, %1 : vector<2x1024xf32>
    %cst_1 = arith.constant 0.000000e+00 : f32
    %cst_2 = arith.constant 6.000000e+00 : f32
    %3 = vector.broadcast %cst_1 : f32 to vector<2x1024xf32>
    %4 = arith.maximumf %3, %2 : vector<2x1024xf32>
    %5 = vector.broadcast %cst_2 : f32 to vector<2x1024xf32>
    %6 = arith.minimumf %5, %4 : vector<2x1024xf32>
    %cst_3 = arith.constant 0.166666672 : f32
    %7 = vector.broadcast %cst_3 : f32 to vector<2x1024xf32>
    %8 = arith.mulf %6, %7 : vector<2x1024xf32>
    %c0_4 = arith.constant 0 : index
    %c0_5 = arith.constant 0 : index
    %9 = vector.load %arg2[%c0_4, %c0_5] : memref<2x1024xf32, #tpu.memory_space<vmem>>, vector<2x1024xf32>
    tpu.vector_store %arg2[%c0_4, %c0_5], %8 {strides = array<i32>} : memref<2x1024xf32, #tpu.memory_space<vmem>>, vector<2x1024xf32>,
    return
  }
  func.func @transform_0(%arg0: i32) -> (i32, i32) {
    %c0_i32 = arith.constant 0 : i32
    %c0_i32_0 = arith.constant 0 : i32
    return %arg0, %c0_i32 : i32, i32
  }
  func.func @transform_1(%arg0: i32) -> (i32, i32) {
    %c0_i32 = arith.constant 0 : i32
    %c0_i32_0 = arith.constant 0 : i32
    return %arg0, %c0_i32 : i32, i32
  }
}

</mosaic_0001>

<llo_original>
// kernel: tpu_custom_call.1
$region0: #{tpu_custom_call.1}
  #allocation0 [shape = 'u32[]', space=smem, size = 0x4, offset = 0x4, fixed_abs, tag = 'smem constant byte address 0x4 - core index']
  #allocation1 [shape = 'u32[144,128]{1,0:T(1,128)}', space=vmem, size = 0x12000, scoped, tag = 'internal scratch']
  %s0 = inlined_call_operand.hbm [shape: f32[2,1024], index: 0, kind: input, shape index: {}]
  %s1 = inlined_call_operand.hbm [shape: f32[2,1024], index: 1, kind: output, shape index: {}]
  %s2 = sld [smem:[#allocation0]]
  $region18: #{tpu_custom_call.1} parent=0
    _
  %s4 = ssub.s32 1, %s2
  %s5 = scalar_select 0, %s4, %s2
  $region1: #{tpu_custom_call.1} parent=0
    #allocation2 [shape = 'u8[8192]{0}', space=vmem, size = 0x2000, scoped, tag = 'input window, operand 0, single buffered']
    #allocation3 [shape = 's32[1]{0}', space=sflag, size = 0x4, scoped, tag = 'scoped memory for tpu_custom_call.1']
    #allocation4 [shape = 's32[1]{0}', space=sflag, size = 0x4, scoped, tag = 'scoped memory for tpu_custom_call.1']
    #allocation5 [shape = 'u8[8192]{0}', space=vmem, size = 0x2000, scoped, tag = 'output window, operand 0, single buffered']
    %6 = vsyncpa [#allocation3], 0
    %7 = vsyncpa [#allocation4], 0
    // Predicated region
    $region2: #{tpu_custom_call.1} parent=1 // pred_check
      _
    $region3: #{tpu_custom_call.1} parent=1 // pred_check_branch
      %9 = sbr.rel (0) target = $region5
    $region4: #{tpu_custom_call.1} parent=1 // pred_region
      %s11 = ssub.s32 256, 256
      %12 = vsyncadd [#allocation3], %s11
      %s14 = sshll.u32 [#allocation2], 4
      %s15 = int_to_ptr.vmem [resolvable:$true] %s14
      %17 = dma.hbm_to_vmem [thread:$0]  %s0, 256, %s15, [#allocation3]
    $region5: #{tpu_custom_call.1} parent=1 // pred_fallthru
      _
    // Predicated region
    $region6: #{tpu_custom_call.1} parent=1 // pred_check
      _
    $region7: #{tpu_custom_call.1} parent=1 // pred_check_branch
      %19 = sbr.rel (0) target = $region9
    $region8: #{tpu_custom_call.1} parent=1 // pred_region
      %20 = dma.done [#allocation3], 256
    $region9: #{tpu_custom_call.1} parent=1 // pred_fallthru
      _
    %v21 = vld [vmem:[#allocation2] sm:$0xff]
    %v22 = vld [vmem:[#allocation2 + $0x8] sm:$0xff]
    %v23 = vadd.f32 %v21, 3.0
    %v24 = vadd.f32 %v22, 3.0
    %v25 = vmax.f32 %v23, 0.0
    %v26 = vmax.f32 %v24, 0.0
    %v27 = vmin.f32 %v25, 6.0
    %v28 = vmin.f32 %v26, 6.0
    %v29 = vmul.f32 %v27, 0.16666667
    %v30 = vmul.f32 %v28, 0.16666667
    %31 = vst [vmem:[#allocation5] sm:$0xff] %v29
    %32 = vst [vmem:[#allocation5 + $0x8] sm:$0xff] %v30
    // Predicated region
    $region10: #{tpu_custom_call.1} parent=1 // pred_check
      _
    $region11: #{tpu_custom_call.1} parent=1 // pred_check_branch
      %34 = sbr.rel (0) target = $region13
    $region12: #{tpu_custom_call.1} parent=1 // pred_region
      %s36 = ssub.s32 256, 256
      %37 = vsyncadd [#allocation4], %s36
      %s39 = sshll.u32 [#allocation5], 4
      %s40 = int_to_ptr.vmem [resolvable:$true] %s39
      %42 = dma.vmem_to_hbm [thread:$0]  %s40, 256, %s1, [#allocation4]
    $region13: #{tpu_custom_call.1} parent=1 // pred_fallthru
      _
    // Predicated region
    $region14: #{tpu_custom_call.1} parent=1 // pred_check
      _
    $region15: #{tpu_custom_call.1} parent=1 // pred_check_branch
      %44 = sbr.rel (0) target = $region17
    $region16: #{tpu_custom_call.1} parent=1 // pred_region
      %45 = dma.done [#allocation4], 256
    $region17: #{tpu_custom_call.1} parent=1 // pred_fallthru
      _
    %46 = vsyncpa [#allocation3], 1
    %47 = vsyncpa [#allocation4], 1

</llo_original>
